<compile_context>
chip_gen: v7x
topology: tpu7x:2x2x1
jax: 0.10.0
libtpu: 0.0.40
codegen_flags: <defaults>
</compile_context>

<pallas_src>
import inspect
from functools import partial

import jax
import jax.numpy as jnp
from jax.experimental import pallas as pl
from jax.experimental.pallas import tpu as pltpu


def _round_up(x, m):
    return ((x + m - 1) // m) * m


def _cdiv(a, b):
    return -(-a // b)


# -----------------------------------------------------------------------------
# Pallas kernel: positional embedding + 2-layer MLP decoder (feature-major).
# -----------------------------------------------------------------------------
def _nef_decoder_kernel(coords_ref, w1p_ref, w1s_ref, w1c_ref, b1_ref,
                        w2_ref, b2_ref, out_ref, *, pos_multires, k_pad):
    """One grid step processes a (3, TN) tile of coordinates (lane-dense).

    scaled (k_pad, TN): row 3k+j = 2^k * coord_j (zero rows beyond 3L).
    Layer 1: h = relu(W1p @ scaled_bf16 + W1s @ sin(scaled) + W1c @ cos(scaled) + b1)
    Layer 2: o = W2t @ h + b2          -> (4, TN)
    Channels: rows 0..2 -> sigmoid (rgb), row 3 -> relu (density).
    """
    tn = coords_ref.shape[1]
    coords = coords_ref[...].astype(jnp.float32)                   # (3, TN)
    L = pos_multires

    # Frequency-major scaled block.  Power-of-two scalar multiplies are exact
    # in f32 (sin/cos argument reduction stays full precision).
    parts = [coords * (2.0 ** k) for k in range(L)]
    pad_rows = k_pad - 3 * L
    if pad_rows > 0:
        parts.append(jnp.zeros((pad_rows, tn), jnp.float32))
    scaled = jnp.concatenate(parts, axis=0)                         # (k_pad, TN)

    # bf16 MXU operands produced directly; zero-pad columns of the weights
    # absorb the pad rows (sin(0)=0, cos(0)=1 hit zero weights).
    sb = scaled.astype(jnp.bfloat16)          # rows 0..2 carry the raw xyz
    s = jnp.sin(scaled).astype(jnp.bfloat16)
    c = jnp.cos(scaled).astype(jnp.bfloat16)

    # Layer 1: three K-aligned MXU dots with f32 accumulation (MXU has slack).
    h = jnp.dot(w1p_ref[...], sb, preferred_element_type=jnp.float32)
    h = h + jnp.dot(w1s_ref[...], s, preferred_element_type=jnp.float32)
    h = h + jnp.dot(w1c_ref[...], c, preferred_element_type=jnp.float32)
    h = jnp.maximum(h + b1_ref[...], 0.0)                           # (hidden, TN)

    # Layer 2 (MXU) + bias.
    o = jnp.dot(w2_ref[...], h.astype(jnp.bfloat16),
                preferred_element_type=jnp.float32) + b2_ref[...]   # (4, TN)

    # Channel activations: sigmoid only on rgb rows, relu only on density.
    # Row-sliced stores stay lane-dense (full 128-lane vregs).
    out_ref[0:3, :] = jax.nn.sigmoid(o[0:3, :])
    out_ref[3:4, :] = jnp.maximum(o[3:4, :], 0.0)


def nef_decoder_pallas(coords, w1p_bf16, w1s_bf16, w1c_bf16, b1_col,
                       w2t_bf16, b2_col, *, pos_multires, k_pad, tile_n=8192):
    """coords: (N, 3).  Returns (4, N_pad) float32 (feature-major rgb+density)."""
    n = coords.shape[0]
    hidden = w1p_bf16.shape[0]
    out_rows = w2t_bf16.shape[0]          # 4

    # Grid / tile sizing:
    #  * N padded only to the 128-lane / tile granularity actually needed.
    #  * tiles capped at tile_n (amortizes ~0.35us/step overhead) while the
    #    per-tile working set stays ~10-16 MB even at hidden=128, L=10.
    #  * >= 2 (even) parallel steps when there is enough work so v7x's two
    #    TensorCores both participate (no effect on single-TC v5e/v6e).
    n128 = _round_up(max(n, 1), 128)
    steps = max(1, _cdiv(n128, tile_n))
    if n128 >= 256:
        steps = _round_up(max(steps, 2), 2)
    tile = _round_up(_cdiv(n128, steps), 128)
    n_pad = steps * tile

    # Lane-dense, contiguous DMA layout: (3, N_pad).
    # TODO(synk): producers holding coords feature-major (3, N) could feed the
    # kernel directly and skip this wrapper transpose/pad HBM pass.
    coords_t = jnp.pad(coords.astype(jnp.float32).T, ((0, 0), (0, n_pad - n)))

    kernel = partial(_nef_decoder_kernel, pos_multires=pos_multires, k_pad=k_pad)
    return pl.pallas_call(
        kernel,
        out_shape=jax.ShapeDtypeStruct((out_rows, n_pad), jnp.float32),
        grid_spec=pltpu.PrefetchScalarGridSpec(
            num_scalar_prefetch=0,
            grid=(steps,),
            in_specs=[
                pl.BlockSpec((3, tile), lambda i: (0, i)),
                pl.BlockSpec((hidden, k_pad), lambda i: (0, 0)),
                pl.BlockSpec((hidden, k_pad), lambda i: (0, 0)),
                pl.BlockSpec((hidden, k_pad), lambda i: (0, 0)),
                pl.BlockSpec((hidden, 1), lambda i: (0, 0)),
                pl.BlockSpec((out_rows, hidden), lambda i: (0, 0)),
                pl.BlockSpec((out_rows, 1), lambda i: (0, 0)),
            ],
            out_specs=pl.BlockSpec((out_rows, tile), lambda i: (0, i)),
        ),
        compiler_params=pltpu.CompilerParams(
            # Parallel grid axis lets Mosaic shard points across v7x's 2 TCs.
            dimension_semantics=("parallel",),
            # Explicit scoped-VMEM budget (v5e default is only 16 MiB); well
            # below v7x's 64 MiB physical VMEM.
            vmem_limit_bytes=48 * 1024 * 1024),
    )(coords_t, w1p_bf16, w1s_bf16, w1c_bf16, b1_col, w2t_bf16, b2_col)


# -----------------------------------------------------------------------------
# BaseNeuralField: faithful reproduction of the dispatch semantics (glue).
# -----------------------------------------------------------------------------
class BaseNeuralField:
    def __init__(self, grid_type='OctreeGrid', interpolation_type='linear',
                 multiscale_type='none', as_type='octree', raymarch_type='voxel',
                 decoder_type='none', embedder_type='none',
                 activation_type='relu', layer_type='none',
                 base_lod=2, num_lods=1, sample_tex=False, dilate=None,
                 feature_dim=16, hidden_dim=128, pos_multires=10,
                 view_multires=4, num_layers=1, position_input=False, **kwargs):
        self.grid_type = grid_type
        self.interpolation_type = interpolation_type
        self.raymarch_type = raymarch_type
        self.embedder_type = embedder_type
        self.activation_type = activation_type
        self.layer_type = layer_type
        self.decoder_type = decoder_type
        self.multiscale_type = multiscale_type
        self.base_lod = base_lod
        self.num_lods = num_lods
        self.sample_tex = sample_tex
        self.dilate = dilate
        self.feature_dim = feature_dim
        self.hidden_dim = hidden_dim
        self.pos_multires = pos_multires
        self.view_multires = view_multires
        self.num_layers = num_layers
        self.position_input = position_input
        self.kwargs = kwargs
        self.grid = None
        self.decoder = None
        self.init_grid()
        self.init_embedder()
        self.init_decoder()
        # TODO(synk): torch.cuda.empty_cache() has no JAX/TPU equivalent.
        self._forward_functions = {}
        self.register_forward_functions()
        self.supported_channels = set(
            [c for cs in self._forward_functions.values() for c in cs])

    # --- base-class hooks (no-ops in the base class) -------------------------
    def init_embedder(self):
        return

    def init_decoder(self):
        return

    def init_grid(self):
        return

    def get_nef_type(self):
        return 'default'

    def _register_forward_function(self, fn, channels):
        if isinstance(channels, str):
            channels = [channels]
        self._forward_functions[fn] = set(channels)

    def register_forward_functions(self):
        # Abstract in the PyTorch base class; concrete behaviour is supplied
        # by ExampleNeuralField below.
        pass

    def get_forward_function(self, channel):
        if channel not in self.get_supported_channels():
            raise Exception(
                f'Channel {channel} is not supported in {self.__class__.__name__}')
        for fn in self._forward_functions:
            if channel in self._forward_functions[fn]:
                return lambda *args, **kwargs: fn(*args, **kwargs)[channel]

    def get_supported_channels(self):
        return self.supported_channels

    def forward(self, channels=None, **kwargs):
        if channels is None:
            requested_channels = self.get_supported_channels()
        elif isinstance(channels, str):
            requested_channels = set([channels])
        else:
            requested_channels = set(channels)
        unsupported = requested_channels - self.get_supported_channels()
        if unsupported:
            raise Exception(
                f'Channels {unsupported} are not supported in {self.__class__.__name__}')
        return_dict = {}
        for fn in self._forward_functions:
            output_channels = self._forward_functions[fn]
            supported = output_channels & requested_channels
            if len(supported) != 0:
                argspec = inspect.getfullargspec(fn)
                defaults = argspec.defaults or ()
                if defaults:
                    required_args = argspec.args[:-len(defaults)][1:]
                    optional_args = argspec.args[-len(defaults):]
                else:
                    required_args = argspec.args[1:]
                    optional_args = []
                input_args = {}
                for _arg in required_args:
                    if _arg not in kwargs:
                        raise Exception(
                            f'Argument {_arg} not found as input to '
                            f'{self.__class__.__name__}.{fn.__name__}()')
                    input_args[_arg] = kwargs[_arg]
                for _arg in optional_args:
                    if _arg in kwargs:
                        input_args[_arg] = kwargs[_arg]
                output = fn(**input_args)
                for channel in supported:
                    return_dict[channel] = output[channel]
        if isinstance(channels, str):
            return return_dict.get(channels, None)
        elif isinstance(channels, list):
            return [return_dict[c] for c in channels]
        else:
            return return_dict

    __call__ = forward


class ExampleNeuralField(BaseNeuralField):
    """Minimal concrete NeF: positional embedding + MLP decoder -> rgb/density."""

    def init_decoder(self):
        L = self.pos_multires
        embed_dim = 3 + 6 * L
        self.embed_dim = embed_dim
        self.k_pad = _round_up(3 * L, 8)      # sublane-aligned frequency-block K
        self.out_rows = 4                     # rgb (3) + density (1)

        key = jax.random.PRNGKey(0)
        k1, k2 = jax.random.split(key)
        scale1 = 1.0 / jnp.sqrt(jnp.float32(embed_dim))
        scale2 = 1.0 / jnp.sqrt(jnp.float32(self.hidden_dim))
        # f32 master parameters, reference (interleaved sin/cos) layout:
        #   emb columns = [x,y,z, sin(2^0 xyz), cos(2^0 xyz), sin(2^1 xyz), ...]
        self.w1 = jax.random.normal(k1, (embed_dim, self.hidden_dim),
                                    jnp.float32) * scale1
        self.b1 = jnp.zeros((self.hidden_dim,), jnp.float32)
        self.w2 = jax.random.normal(k2, (self.hidden_dim, 4),
                                    jnp.float32) * scale2
        self.b2 = jnp.zeros((4,), jnp.float32)

        # Kernel-layout parameters: split W1 into position / sin / cos groups
        # laid out against the kernel's frequency-major scaled block (row 3k+j
        # of the block = 2^k * coord_j); zero K-padding folded into the weights.
        w1p = jnp.zeros((self.k_pad, self.hidden_dim), jnp.float32)
        w1s = jnp.zeros((self.k_pad, self.hidden_dim), jnp.float32)
        w1c = jnp.zeros((self.k_pad, self.hidden_dim), jnp.float32)
        w1p = w1p.at[0:3].set(self.w1[0:3])                  # raw xyz term
        for k in range(L):
            w1s = w1s.at[3 * k:3 * k + 3].set(self.w1[3 + 6 * k:6 + 6 * k])
            w1c = w1c.at[3 * k:3 * k + 3].set(self.w1[6 + 6 * k:9 + 6 * k])
        self.w1p_bf16 = w1p.T.astype(jnp.bfloat16)           # (hidden, k_pad)
        self.w1s_bf16 = w1s.T.astype(jnp.bfloat16)
        self.w1c_bf16 = w1c.T.astype(jnp.bfloat16)
        self.b1_col = self.b1.reshape(self.hidden_dim, 1)    # (hidden, 1)

        self.w2t_bf16 = self.w2.T.astype(jnp.bfloat16)       # (4, hidden)
        self.b2_col = self.b2.reshape(4, 1)                  # (4, 1)

    def register_forward_functions(self):
        self._register_forward_function(self.rgba, ["density", "rgb"])

    def rgba(self, coords, ray_d=None):
        n = coords.shape[0]
        out = nef_decoder_pallas(
            coords, self.w1p_bf16, self.w1s_bf16, self.w1c_bf16, self.b1_col,
            self.w2t_bf16, self.b2_col,
            pos_multires=self.pos_multires, k_pad=self.k_pad)
        # TODO(synk): consumers that accept feature-major channels could take
        # out[0:3] / out[3:4] directly and skip these wrapper transposes.
        rgb = out[0:3, :n].T          # (N, 3)
        density = out[3:4, :n].T      # (N, 1)
        return {"rgb": rgb, "density": density}


if __name__ == "__main__":
    # Small, deterministic example inputs.
    nef = ExampleNeuralField(hidden_dim=32, pos_multires=4, num_layers=1)

    key = jax.random.PRNGKey(0)
    coords = jax.random.uniform(key, (256, 3), jnp.float32, minval=-1.0, maxval=1.0)

    # Dict-of-channels path (channels=None)
    out = nef(coords=coords)
    jax.block_until_ready(out["rgb"])
    jax.block_until_ready(out["density"])
    assert out["rgb"].shape == (256, 3) and out["density"].shape == (256, 1)

    # String-channel path
    rgb = nef(channels="rgb", coords=coords)
    jax.block_until_ready(rgb)
    assert rgb.shape == (256, 3)

    # Sanity: kernel matches a pure-JAX reference using the same bf16 MXU precision.
    def ref_decoder(c):
        feats = [c]
        for k in range(nef.pos_multires):
            f = jnp.float32(2.0 ** k)
            feats.append(jnp.sin(f * c))
            feats.append(jnp.cos(f * c))
        emb = jnp.concatenate(feats, axis=-1)
        h = jnp.dot(emb.astype(jnp.bfloat16), nef.w1.astype(jnp.bfloat16),
                    preferred_element_type=jnp.float32) + nef.b1
        h = jnp.maximum(h, 0.0)
        o = jnp.dot(h.astype(jnp.bfloat16), nef.w2.astype(jnp.bfloat16),
                    preferred_element_type=jnp.float32) + nef.b2
        return jax.nn.sigmoid(o[:, 0:3]), jnp.maximum(o[:, 3:4], 0.0)

    ref_rgb, ref_density = ref_decoder(coords)
    assert jnp.allclose(rgb, ref_rgb, atol=5e-3), \
        float(jnp.max(jnp.abs(rgb - ref_rgb)))
    assert jnp.allclose(out["density"], ref_density, atol=5e-3), \
        float(jnp.max(jnp.abs(out["density"] - ref_density)))

    print("KERNEL_OK")
</pallas_src>

<mosaic_0001>
module attributes {stable_mosaic.version = 11 : i64} {
  func.func @_nef_decoder_kernel(%arg0: i32, %arg1: memref<3x128xf32, #tpu.memory_space<vmem>>, %arg2: memref<32x16xbf16, #tpu.memory_space<vmem>>, %arg3: memref<32x16xbf16, #tpu.memory_space<vmem>>, %arg4: memref<32x16xbf16, #tpu.memory_space<vmem>>, %arg5: memref<32x1xf32, #tpu.memory_space<vmem>>, %arg6: memref<4x32xbf16, #tpu.memory_space<vmem>>, %arg7: memref<4x1xf32, #tpu.memory_space<vmem>>, %arg8: memref<4x128xf32, #tpu.memory_space<vmem>>) attributes {dimension_semantics = [#tpu.dimension_semantics<parallel>], iteration_bounds = array<i64: 2>, scalar_prefetch = 0 : i64, scratch_operands = 0 : i64, tpu.core_type = #tpu.core_type<tc>, window_params = [{transform_indices = @transform_0, window_bounds = array<i64: 3, 128>}, {pipeline_mode = #tpu.pipeline_mode<synchronous>, transform_indices = @transform_1, window_bounds = array<i64: 32, 16>}, {pipeline_mode = #tpu.pipeline_mode<synchronous>, transform_indices = @transform_2, window_bounds = array<i64: 32, 16>}, {pipeline_mode = #tpu.pipeline_mode<synchronous>, transform_indices = @transform_3, window_bounds = array<i64: 32, 16>}, {pipeline_mode = #tpu.pipeline_mode<synchronous>, transform_indices = @transform_4, window_bounds = array<i64: 32, 1>}, {pipeline_mode = #tpu.pipeline_mode<synchronous>, transform_indices = @transform_5, window_bounds = array<i64: 4, 32>}, {pipeline_mode = #tpu.pipeline_mode<synchronous>, transform_indices = @transform_6, window_bounds = array<i64: 4, 1>}, {transform_indices = @transform_7, window_bounds = array<i64: 4, 128>}]} {
    %c0 = arith.constant 0 : index
    %c0_0 = arith.constant 0 : index
    %0 = vector.load %arg1[%c0, %c0_0] : memref<3x128xf32, #tpu.memory_space<vmem>>, vector<3x128xf32>
    %cst = arith.constant 1.000000e+00 : f32
    %1 = vector.broadcast %cst : f32 to vector<3x128xf32>
    %2 = arith.mulf %0, %1 : vector<3x128xf32>
    %cst_1 = arith.constant 2.000000e+00 : f32
    %3 = vector.broadcast %cst_1 : f32 to vector<3x128xf32>
    %4 = arith.mulf %0, %3 : vector<3x128xf32>
    %cst_2 = arith.constant 4.000000e+00 : f32
    %5 = vector.broadcast %cst_2 : f32 to vector<3x128xf32>
    %6 = arith.mulf %0, %5 : vector<3x128xf32>
    %cst_3 = arith.constant 8.000000e+00 : f32
    %7 = vector.broadcast %cst_3 : f32 to vector<3x128xf32>
    %8 = arith.mulf %0, %7 : vector<3x128xf32>
    %cst_4 = arith.constant 0.000000e+00 : f32
    %9 = vector.broadcast %cst_4 : f32 to vector<4x128xf32>
    %10 = tpu.concatenate %2, %4, %6, %8, %9 in 0 : vector<3x128xf32>, vector<3x128xf32>, vector<3x128xf32>, vector<3x128xf32>, vector<4x128xf32> -> vector<16x128xf32>
    %11 = arith.truncf %10 : vector<16x128xf32> to vector<16x128xbf16>
    %12 = math.sin %10 : vector<16x128xf32>
    %13 = arith.truncf %12 : vector<16x128xf32> to vector<16x128xbf16>
    %14 = math.cos %10 : vector<16x128xf32>
    %15 = arith.truncf %14 : vector<16x128xf32> to vector<16x128xbf16>
    %c0_5 = arith.constant 0 : index
    %c0_6 = arith.constant 0 : index
    %16 = vector.load %arg2[%c0_5, %c0_6] : memref<32x16xbf16, #tpu.memory_space<vmem>>, vector<32x16xbf16>
    %cst_7 = arith.constant dense<0.000000e+00> : vector<32x128xf32>
    %17 = tpu.matmul %16, %11, %cst_7 {dimension_numbers = #tpu.dot_dimension_numbers<[1], [0], [0], [1], [0, 0, 1, 1], [], []>} : vector<32x16xbf16>, vector<16x128xbf16>, vector<32x128xf32> -> vector<32x128xf32>
    %c0_8 = arith.constant 0 : index
    %c0_9 = arith.constant 0 : index
    %18 = vector.load %arg3[%c0_8, %c0_9] : memref<32x16xbf16, #tpu.memory_space<vmem>>, vector<32x16xbf16>
    %cst_10 = arith.constant dense<0.000000e+00> : vector<32x128xf32>
    %19 = tpu.matmul %18, %13, %cst_10 {dimension_numbers = #tpu.dot_dimension_numbers<[1], [0], [0], [1], [0, 0, 1, 1], [], []>} : vector<32x16xbf16>, vector<16x128xbf16>, vector<32x128xf32> -> vector<32x128xf32>
    %20 = arith.addf %17, %19 : vector<32x128xf32>
    %c0_11 = arith.constant 0 : index
    %c0_12 = arith.constant 0 : index
    %21 = vector.load %arg4[%c0_11, %c0_12] : memref<32x16xbf16, #tpu.memory_space<vmem>>, vector<32x16xbf16>
    %cst_13 = arith.constant dense<0.000000e+00> : vector<32x128xf32>
    %22 = tpu.matmul %21, %15, %cst_13 {dimension_numbers = #tpu.dot_dimension_numbers<[1], [0], [0], [1], [0, 0, 1, 1], [], []>} : vector<32x16xbf16>, vector<16x128xbf16>, vector<32x128xf32> -> vector<32x128xf32>
    %23 = arith.addf %20, %22 : vector<32x128xf32>
    %c0_14 = arith.constant 0 : index
    %c0_15 = arith.constant 0 : index
    %24 = vector.load %arg5[%c0_14, %c0_15] : memref<32x1xf32, #tpu.memory_space<vmem>>, vector<32x1xf32>
    %25 = vector.broadcast %24 : vector<32x1xf32> to vector<32x128xf32>
    %26 = arith.addf %23, %25 : vector<32x128xf32>
    %cst_16 = arith.constant 0.000000e+00 : f32
    %27 = vector.broadcast %cst_16 : f32 to vector<32x128xf32>
    %28 = arith.maximumf %26, %27 : vector<32x128xf32>
    %c0_17 = arith.constant 0 : index
    %c0_18 = arith.constant 0 : index
    %29 = vector.load %arg6[%c0_17, %c0_18] : memref<4x32xbf16, #tpu.memory_space<vmem>>, vector<4x32xbf16>
    %30 = arith.truncf %28 : vector<32x128xf32> to vector<32x128xbf16>
    %cst_19 = arith.constant dense<0.000000e+00> : vector<4x128xf32>
    %31 = tpu.matmul %29, %30, %cst_19 {dimension_numbers = #tpu.dot_dimension_numbers<[1], [0], [0], [1], [0, 0, 1, 1], [], []>} : vector<4x32xbf16>, vector<32x128xbf16>, vector<4x128xf32> -> vector<4x128xf32>
    %c0_20 = arith.constant 0 : index
    %c0_21 = arith.constant 0 : index
    %32 = vector.load %arg7[%c0_20, %c0_21] : memref<4x1xf32, #tpu.memory_space<vmem>>, vector<4x1xf32>
    %33 = vector.broadcast %32 : vector<4x1xf32> to vector<4x128xf32>
    %34 = arith.addf %31, %33 : vector<4x128xf32>
    %35 = vector.extract_strided_slice %34 {offsets = [0, 0], sizes = [3, 128], strides = [1, 1]} : vector<4x128xf32> to vector<3x128xf32>
    %36 = arith.negf %35 : vector<3x128xf32>
    %37 = math.exp %36 : vector<3x128xf32>
    %cst_22 = arith.constant 1.000000e+00 : f32
    %38 = vector.broadcast %cst_22 : f32 to vector<3x128xf32>
    %39 = arith.addf %38, %37 : vector<3x128xf32>
    %40 = arith.divf %38, %39 : vector<3x128xf32>
    %c0_23 = arith.constant 0 : index
    %c0_24 = arith.constant 0 : index
    %41 = vector.load %arg8[%c0_23, %c0_24] : memref<4x128xf32, #tpu.memory_space<vmem>>, vector<3x128xf32>
    tpu.vector_store %arg8[%c0_23, %c0_24], %40 {strides = array<i32>} : memref<4x128xf32, #tpu.memory_space<vmem>>, vector<3x128xf32>,
    %42 = vector.extract_strided_slice %34 {offsets = [3, 0], sizes = [1, 128], strides = [1, 1]} : vector<4x128xf32> to vector<1x128xf32>
    %cst_25 = arith.constant 0.000000e+00 : f32
    %43 = vector.broadcast %cst_25 : f32 to vector<1x128xf32>
    %44 = arith.maximumf %42, %43 : vector<1x128xf32>
    %c3 = arith.constant 3 : index
    %c0_26 = arith.constant 0 : index
    %45 = vector.load %arg8[%c3, %c0_26] : memref<4x128xf32, #tpu.memory_space<vmem>>, vector<1x128xf32>
    tpu.vector_store %arg8[%c3, %c0_26], %44 {strides = array<i32>} : memref<4x128xf32, #tpu.memory_space<vmem>>, vector<1x128xf32>,
    return
  }
  func.func @transform_0(%arg0: i32) -> (i32, i32) {
    %c0_i32 = arith.constant 0 : i32
    %c0_i32_0 = arith.constant 0 : i32
    return %c0_i32, %arg0 : i32, i32
  }
  func.func @transform_1(%arg0: i32) -> (i32, i32) {
    %c0_i32 = arith.constant 0 : i32
    %c0_i32_0 = arith.constant 0 : i32
    %c0_i32_1 = arith.constant 0 : i32
    return %c0_i32, %c0_i32_0 : i32, i32
  }
  func.func @transform_2(%arg0: i32) -> (i32, i32) {
    %c0_i32 = arith.constant 0 : i32
    %c0_i32_0 = arith.constant 0 : i32
    %c0_i32_1 = arith.constant 0 : i32
    return %c0_i32, %c0_i32_0 : i32, i32
  }
  func.func @transform_3(%arg0: i32) -> (i32, i32) {
    %c0_i32 = arith.constant 0 : i32
    %c0_i32_0 = arith.constant 0 : i32
    %c0_i32_1 = arith.constant 0 : i32
    return %c0_i32, %c0_i32_0 : i32, i32
  }
  func.func @transform_4(%arg0: i32) -> (i32, i32) {
    %c0_i32 = arith.constant 0 : i32
    %c0_i32_0 = arith.constant 0 : i32
    %c0_i32_1 = arith.constant 0 : i32
    return %c0_i32, %c0_i32_0 : i32, i32
  }
  func.func @transform_5(%arg0: i32) -> (i32, i32) {
    %c0_i32 = arith.constant 0 : i32
    %c0_i32_0 = arith.constant 0 : i32
    %c0_i32_1 = arith.constant 0 : i32
    return %c0_i32, %c0_i32_0 : i32, i32
  }
  func.func @transform_6(%arg0: i32) -> (i32, i32) {
    %c0_i32 = arith.constant 0 : i32
    %c0_i32_0 = arith.constant 0 : i32
    %c0_i32_1 = arith.constant 0 : i32
    return %c0_i32, %c0_i32_0 : i32, i32
  }
  func.func @transform_7(%arg0: i32) -> (i32, i32) {
    %c0_i32 = arith.constant 0 : i32
    %c0_i32_0 = arith.constant 0 : i32
    return %c0_i32, %arg0 : i32, i32
  }
}

</mosaic_0001>

<llo_original>
// kernel: tpu_custom_call.1
$region0: #{tpu_custom_call.1}
  #allocation0 [shape = 'u32[]', space=smem, size = 0x4, offset = 0x4, fixed_abs, tag = 'smem constant byte address 0x4 - core index']
  #allocation1 [shape = 'u32[144,128]{1,0:T(1,128)}', space=vmem, size = 0x12000, scoped, tag = 'internal scratch']
  %s0 = inlined_call_operand.vmem [shape: f32[3,256], index: 0, kind: input, shape index: {}]
  %s1 = inlined_call_operand.vmem [shape: bf16[32,16], index: 1, kind: input, shape index: {}]
  %s2 = inlined_call_operand.vmem [shape: bf16[32,16], index: 2, kind: input, shape index: {}]
  %s3 = inlined_call_operand.vmem [shape: bf16[32,16], index: 3, kind: input, shape index: {}]
  %s4 = inlined_call_operand.vmem [shape: f32[32,1], index: 4, kind: input, shape index: {}]
  %s5 = inlined_call_operand.vmem [shape: bf16[4,32], index: 5, kind: input, shape index: {}]
  %s6 = inlined_call_operand.vmem [shape: f32[4,1], index: 6, kind: input, shape index: {}]
  %s7 = inlined_call_operand.hbm [shape: f32[4,256], index: 7, kind: output, shape index: {}]
  %s8 = sld [smem:[#allocation0]]
  $region61: #{tpu_custom_call.1} parent=0
    _
  %s10 = ssub.s32 1, %s8
  %s11 = scalar_select 0, %s10, %s8
  $region1: #{tpu_custom_call.1} parent=0
    #allocation2 [shape = 'u8[4096]{0}', space=vmem, size = 0x1000, scoped, tag = 'output window, operand 0']
    #allocation3 [shape = 's32[2]{0}', space=sflag, size = 0x8, scoped, tag = 'scoped memory for tpu_custom_call.1']
    %12 = vsyncpa [#allocation3], 0
    %s13 = scalar_lea.sflag [#allocation3], 1
    %14 = vsyncpa %s13, 0
    loop: start=0, step=1, limit=4
    $region2: #{tpu_custom_call.1} parent=1 // loop_pre_header
      _
    $region3: #{tpu_custom_call.1} parent=1 // loop_header
      %s16 = sphi 0, %s20
      %p17 = scmp.ge.s32.totalorder %s16, 4
      %s26 = sphi 0, %s28
      %s29 = sphi 0, %s26
      %s30 = sphi 0, %s29
      %s46 = sphi 0, %s30
      %s50 = sphi 0, %s50
      %s52 = sphi 0, %s50
      %s53 = sphi 0, %s52
      %s67 = sphi 0, %s53
      %s71 = sphi 0, %s71
      %s73 = sphi 0, %s71
      %s74 = sphi 0, %s73
      %s88 = sphi 0, %s74
      %s92 = sphi 0, %s92
      %s94 = sphi 0, %s92
      %s95 = sphi 0, %s94
      %s109 = sphi 0, %s95
      %s113 = sphi 0, %s113
      %s115 = sphi 0, %s113
      %s116 = sphi 0, %s115
      %s130 = sphi 0, %s116
      %s134 = sphi 0, %s134
      %s136 = sphi 0, %s134
      %s137 = sphi 0, %s136
      %s151 = sphi 0, %s137
      %s155 = sphi 0, %s155
      %s157 = sphi 0, %s155
      %s158 = sphi 0, %s157
      %s172 = sphi 0, %s158
      %s178 = sphi 0, %s180
      %s181 = sphi 0, %s178
      %s182 = sphi 0, %s181
      %s198 = sphi 0, %s182
    $region4: #{tpu_custom_call.1} parent=1 // loop_header_branch
      %19 = sbr.rel (%p17) target = $region8
    $region5: #{tpu_custom_call.1} parent=1 // loop_body
      %s21 = ssub.s32 %s16, 1
      %s22 = ssub.s32 %s16, 2
      %s23 = sadd.s32 %s16, 1
      %s24 = ssub.s32 %s16, %s23
      %p25 = scmp.eq.s32.totalorder %s24, 0
      %s27 = sadd.s32 %s26, 1
      %s28 = scalar_select %p25, %s26, %s27
      %p31 = pneg %p25
      %p32 = scmp.eq.s32.totalorder %s16, 1
      %p33 = por %p31, %p32
      %p34 = scmp.ne.s32.totalorder %s26, %s29
      %p35 = scmp.eq.s32.totalorder %s16, 0
      %p36 = por %p34, %p35
      %p37 = scmp.ne.s32.totalorder %s26, %s29
      %p38 = scmp.eq.s32.totalorder %s21, 1
      %p39 = por %p37, %p38
      %p40 = scmp.ne.s32.totalorder %s29, %s30
      %p41 = scmp.eq.s32.totalorder %s21, 0
      %p42 = por %p40, %p41
      %p43 = scmp.ne.s32.totalorder %s29, %s30
      %p44 = scmp.eq.s32.totalorder %s22, 1
      %p45 = por %p43, %p44
      %p47 = scmp.ne.s32.totalorder %s30, %s46
      %p48 = scmp.eq.s32.totalorder %s22, 0
      %p49 = por %p47, %p48
      %s51 = sadd.s32 %s50, 1
      %p54 = scmp.eq.s32.totalorder %s16, 1
      %p55 = scmp.ne.s32.totalorder %s50, %s52
      %p56 = scmp.eq.s32.totalorder %s16, 0
      %p57 = por %p55, %p56
      %p58 = scmp.ne.s32.totalorder %s50, %s52
      %p59 = scmp.eq.s32.totalorder %s21, 1
      %p60 = por %p58, %p59
      %p61 = scmp.ne.s32.totalorder %s52, %s53
      %p62 = scmp.eq.s32.totalorder %s21, 0
      %p63 = por %p61, %p62
      %p64 = scmp.ne.s32.totalorder %s52, %s53
      %p65 = scmp.eq.s32.totalorder %s22, 1
      %p66 = por %p64, %p65
      %p68 = scmp.ne.s32.totalorder %s53, %s67
      %p69 = scmp.eq.s32.totalorder %s22, 0
      %p70 = por %p68, %p69
      %s72 = sadd.s32 %s71, 1
      %p75 = scmp.eq.s32.totalorder %s16, 1
      %p76 = scmp.ne.s32.totalorder %s71, %s73
      %p77 = scmp.eq.s32.totalorder %s16, 0
      %p78 = por %p76, %p77
      %p79 = scmp.ne.s32.totalorder %s71, %s73
      %p80 = scmp.eq.s32.totalorder %s21, 1
      %p81 = por %p79, %p80
      %p82 = scmp.ne.s32.totalorder %s73, %s74
      %p83 = scmp.eq.s32.totalorder %s21, 0
      %p84 = por %p82, %p83
      %p85 = scmp.ne.s32.totalorder %s73, %s74
      %p86 = scmp.eq.s32.totalorder %s22, 1
      %p87 = por %p85, %p86
      %p89 = scmp.ne.s32.totalorder %s74, %s88
      %p90 = scmp.eq.s32.totalorder %s22, 0
      %p91 = por %p89, %p90
      %s93 = sadd.s32 %s92, 1
      %p96 = scmp.eq.s32.totalorder %s16, 1
      %p97 = scmp.ne.s32.totalorder %s92, %s94
      %p98 = scmp.eq.s32.totalorder %s16, 0
      %p99 = por %p97, %p98
      %p100 = scmp.ne.s32.totalorder %s92, %s94
      %p101 = scmp.eq.s32.totalorder %s21, 1
      %p102 = por %p100, %p101
      %p103 = scmp.ne.s32.totalorder %s94, %s95
      %p104 = scmp.eq.s32.totalorder %s21, 0
      %p105 = por %p103, %p104
      %p106 = scmp.ne.s32.totalorder %s94, %s95
      %p107 = scmp.eq.s32.totalorder %s22, 1
      %p108 = por %p106, %p107
      %p110 = scmp.ne.s32.totalorder %s95, %s109
      %p111 = scmp.eq.s32.totalorder %s22, 0
      %p112 = por %p110, %p111
      %s114 = sadd.s32 %s113, 1
      %p117 = scmp.eq.s32.totalorder %s16, 1
      %p118 = scmp.ne.s32.totalorder %s113, %s115
      %p119 = scmp.eq.s32.totalorder %s16, 0
      %p120 = por %p118, %p119
      %p121 = scmp.ne.s32.totalorder %s113, %s115
      %p122 = scmp.eq.s32.totalorder %s21, 1
      %p123 = por %p121, %p122
      %p124 = scmp.ne.s32.totalorder %s115, %s116
      %p125 = scmp.eq.s32.totalorder %s21, 0
      %p126 = por %p124, %p125
      %p127 = scmp.ne.s32.totalorder %s115, %s116
      %p128 = scmp.eq.s32.totalorder %s22, 1
      %p129 = por %p127, %p128
      %p131 = scmp.ne.s32.totalorder %s116, %s130
      %p132 = scmp.eq.s32.totalorder %s22, 0
      %p133 = por %p131, %p132
      %s135 = sadd.s32 %s134, 1
      %p138 = scmp.eq.s32.totalorder %s16, 1
      %p139 = scmp.ne.s32.totalorder %s134, %s136
      %p140 = scmp.eq.s32.totalorder %s16, 0
      %p141 = por %p139, %p140
      %p142 = scmp.ne.s32.totalorder %s134, %s136
      %p143 = scmp.eq.s32.totalorder %s21, 1
      %p144 = por %p142, %p143
      %p145 = scmp.ne.s32.totalorder %s136, %s137
      %p146 = scmp.eq.s32.totalorder %s21, 0
      %p147 = por %p145, %p146
      %p148 = scmp.ne.s32.totalorder %s136, %s137
      %p149 = scmp.eq.s32.totalorder %s22, 1
      %p150 = por %p148, %p149
      %p152 = scmp.ne.s32.totalorder %s137, %s151
      %p153 = scmp.eq.s32.totalorder %s22, 0
      %p154 = por %p152, %p153
      %s156 = sadd.s32 %s155, 1
      %p159 = scmp.eq.s32.totalorder %s16, 1
      %p160 = scmp.ne.s32.totalorder %s155, %s157
      %p161 = scmp.eq.s32.totalorder %s16, 0
      %p162 = por %p160, %p161
      %p163 = scmp.ne.s32.totalorder %s155, %s157
      %p164 = scmp.eq.s32.totalorder %s21, 1
      %p165 = por %p163, %p164
      %p166 = scmp.ne.s32.totalorder %s157, %s158
      %p167 = scmp.eq.s32.totalorder %s21, 0
      %p168 = por %p166, %p167
      %p169 = scmp.ne.s32.totalorder %s157, %s158
      %p170 = scmp.eq.s32.totalorder %s22, 1
      %p171 = por %p169, %p170
      %p173 = scmp.ne.s32.totalorder %s158, %s172
      %p174 = scmp.eq.s32.totalorder %s22, 0
      %p175 = por %p173, %p174
      %s176 = ssub.s32 %s16, %s23
      %p177 = scmp.eq.s32.totalorder %s176, 0
      %s179 = sadd.s32 %s178, 1
      %s180 = scalar_select %p177, %s178, %s179
      %p183 = pneg %p177
      %p184 = scmp.eq.s32.totalorder %s16, 1
      %p185 = por %p183, %p184
      %p186 = scmp.ne.s32.totalorder %s178, %s181
      %p187 = scmp.eq.s32.totalorder %s16, 0
      %p188 = por %p186, %p187
      %p189 = scmp.ne.s32.totalorder %s178, %s181
      %p190 = scmp.eq.s32.totalorder %s21, 1
      %p191 = por %p189, %p190
      %p192 = scmp.ne.s32.totalorder %s181, %s182
      %p193 = scmp.eq.s32.totalorder %s21, 0
      %p194 = por %p192, %p193
      %p195 = scmp.ne.s32.totalorder %s181, %s182
      %p196 = scmp.eq.s32.totalorder %s22, 1
      %p197 = por %p195, %p196
      %p199 = scmp.ne.s32.totalorder %s182, %s198
      %p200 = scmp.eq.s32.totalorder %s22, 0
      %p201 = por %p199, %p200
      %p202 = scmp.le.s32.totalorder 1, %s16
      %p203 = scmp.lt.s32.totalorder %s16, 3
      %p204 = pnand %p202, %p203
      %p205 = pneg %p204
      // Predicated region
      $region9: #{tpu_custom_call.1} parent=5 // pred_check
        _
      $region10: #{tpu_custom_call.1} parent=5 // pred_check_branch
        %207 = sbr.rel (%p204) target = $region12
      $region11: #{tpu_custom_call.1} parent=5 // pred_region
        %s208 = ssub.s32 %s16, 1
        // Predicated region
        $region13: #{tpu_custom_call.1} parent=11 // pred_check
          %p209 = pneg %p63
        $region14: #{tpu_custom_call.1} parent=11 // pred_check_branch
          %211 = sbr.rel (%p209) target = $region16
        $region15: #{tpu_custom_call.1} parent=11 // pred_region
          _
        $region16: #{tpu_custom_call.1} parent=11 // pred_fallthru
          _
        // Predicated region
        $region17: #{tpu_custom_call.1} parent=11 // pred_check
          %p212 = pneg %p84
        $region18: #{tpu_custom_call.1} parent=11 // pred_check_branch
          %214 = sbr.rel (%p212) target = $region20
        $region19: #{tpu_custom_call.1} parent=11 // pred_region
          _
        $region20: #{tpu_custom_call.1} parent=11 // pred_fallthru
          _
        // Predicated region
        $region21: #{tpu_custom_call.1} parent=11 // pred_check
          %p215 = pneg %p105
        $region22: #{tpu_custom_call.1} parent=11 // pred_check_branch
          %217 = sbr.rel (%p215) target = $region24
        $region23: #{tpu_custom_call.1} parent=11 // pred_region
          _
        $region24: #{tpu_custom_call.1} parent=11 // pred_fallthru
          _
        // Predicated region
        $region25: #{tpu_custom_call.1} parent=11 // pred_check
          %p218 = pneg %p126
        $region26: #{tpu_custom_call.1} parent=11 // pred_check_branch
          %220 = sbr.rel (%p218) target = $region28
        $region27: #{tpu_custom_call.1} parent=11 // pred_region
          _
        $region28: #{tpu_custom_call.1} parent=11 // pred_fallthru
          _
        // Predicated region
        $region29: #{tpu_custom_call.1} parent=11 // pred_check
          %p221 = pneg %p147
        $region30: #{tpu_custom_call.1} parent=11 // pred_check_branch
          %223 = sbr.rel (%p221) target = $region32
        $region31: #{tpu_custom_call.1} parent=11 // pred_region
          _
        $region32: #{tpu_custom_call.1} parent=11 // pred_fallthru
          _
        // Predicated region
        $region33: #{tpu_custom_call.1} parent=11 // pred_check
          %p224 = pneg %p168
        $region34: #{tpu_custom_call.1} parent=11 // pred_check_branch
          %226 = sbr.rel (%p224) target = $region36
        $region35: #{tpu_custom_call.1} parent=11 // pred_region
          _
        $region36: #{tpu_custom_call.1} parent=11 // pred_fallthru
          _
      $region12: #{tpu_custom_call.1} parent=5 // pred_fallthru
        _
      %p227 = scmp.lt.s32.totalorder %s16, 2
      // Predicated region
      $region37: #{tpu_custom_call.1} parent=5 // pred_check
        %p228 = pneg %p227
      $region38: #{tpu_custom_call.1} parent=5 // pred_check_branch
        %230 = sbr.rel (%p228) target = $region40
      $region39: #{tpu_custom_call.1} parent=5 // pred_region
        // Predicated region
        $region41: #{tpu_custom_call.1} parent=39 // pred_check
          %p231 = pneg %p36
        $region42: #{tpu_custom_call.1} parent=39 // pred_check_branch
          %233 = sbr.rel (%p231) target = $region44
        $region43: #{tpu_custom_call.1} parent=39 // pred_region
          %p234 = scmp.lt.s32.totalorder %s16, 1
          %s235 = scalar_select %p234, %s16, 1
          %s236 = smul.addr %s235, 4
          %s237 = scalar_lea.vmem %s0, %s236
        $region44: #{tpu_custom_call.1} parent=39 // pred_fallthru
          _
      $region40: #{tpu_custom_call.1} parent=5 // pred_fallthru
        _
      %p238 = scmp.le.s32.totalorder 1, %s16
      %p239 = scmp.lt.s32.totalorder %s16, 3
      %p240 = pnand %p238, %p239
      %p241 = pneg %p240
      // Predicated region
      $region45: #{tpu_custom_call.1} parent=5 // pred_check
        _
      $region46: #{tpu_custom_call.1} parent=5 // pred_check_branch
        %243 = sbr.rel (%p240) target = $region48
      $region47: #{tpu_custom_call.1} parent=5 // pred_region
        %s244 = ssub.s32 %s16, 1
        %p245 = scmp.lt.s32.totalorder %s21, 1
        %s246 = scalar_select %p245, %s21, 1
        %s247 = smul.addr %s246, 4
        %s248 = scalar_lea.vmem %s0, %s247
        %p249 = pneg %p42
        %p250 = pneg %p39
        %p251 = pneg %p63
        %p252 = pneg %p60
        %p253 = pneg %p84
        %p254 = pneg %p81
        %p255 = pneg %p105
        %p256 = pneg %p102
        %p257 = pneg %p126
        %p258 = pneg %p123
        %p259 = pneg %p147
        %p260 = pneg %p144
        %p261 = pneg %p168
        %p262 = pneg %p165
        %p263 = pneg %p194
        %p264 = pneg %p191
        %s265 = sand.u32 %s181, 1
        %s266 = scalar_lea.sflag [#allocation3], %s265
        %s267 = sand.u32 %s181, 1
        %s268 = smul.addr %s267, 4
        %s269 = scalar_lea.vmem [#allocation2], %s268
        %p270 = scmp.lt.s32.totalorder %s21, 1
        %s271 = scalar_select %p270, %s21, 1
        %s272 = smul.addr %s271, 4
        %s273 = scalar_lea.vmem %s0, %s272
        %v275 = vld [vmem:[%s273] sm:$0x7]
        %v276 = vmul.f32 %v275, 2.0
        %v277 = vmul.f32 %v275, 4.0
        %v278 = vmul.f32 %v275, 8.0
        %v280 = vrot.slane %v276, 5
        %v283 = vrot.slane %v277, 2
        %v286 = vrot.slane %v278, 7
        %vm288 = vcmask 1042432
        %v289 = vsel %vm288, %v275, %v280
        %vm290 = vcmask 1045504
        %v291 = vsel %vm290, %v289, %v283
        %vm292 = vcmask 1040384
        %v293 = vsel %vm292, %v283, %v286
        %vm294 = vcmask 1043456
        %v295 = vsel %vm294, %v293, 0.0
        %v296 = vpack.c.bf16 %v295, %v291
        %v297 = vand.u32 2147483647, %v291
        %vm298 = vcmp.le.f32.partialorder %v297, 0.7853982
        %vm299 = vcmp.lt.s32.totalorder %v291, 0
        %v300 = vand.u32 %v291, 2139095040
        %v301 = vshrl.u32 %v300, 23
        %v302 = vsub.s32 %v301, 127
        %v303 = vand.u32 2147483647, %v291
        %v304 = vand.u32 %v303, 8388607
        %v305 = vor.u32 %v304, 8388608
        %v306 = vsub.s32 0, %v305
        %v307 = vadd.s32 %v302, 1
        %vm308 = vcmp.gt.s32.totalorder %v307, 0
        %v309 = vsel %vm308, %v307, 0
        %v310 = vshrl.u32 %v309, 5
        %v311 = vand.u32 %v309, 31
        %v312 = vsub.s32 32, %v311
        %v313 = vshrl.u32 683565275, %v312
        %v314 = vshll.u32 683565275, %v311
        %v315 = vshrl.u32 2475754826, %v312
        %v316 = vor.u32 %v314, %v315
        %v317 = vshll.u32 2475754826, %v311
        %v318 = vshrl.u32 2131351028, %v312
        %v319 = vor.u32 %v317, %v318
        %v320 = vshll.u32 2131351028, %v311
        %v321 = vshrl.u32 2102212464, %v312
        %v322 = vor.u32 %v320, %v321
        %v323 = vshll.u32 2102212464, %v311
        %v324 = vshrl.u32 920167782, %v312
        %v325 = vor.u32 %v323, %v324
        %v326 = vshll.u32 920167782, %v311
        %v327 = vshrl.u32 1326507024, %v312
        %v328 = vor.u32 %v326, %v327
        %vm329 = vcmp.lt.s32.totalorder %v310, 1
        %vm330 = vcmp.lt.s32.totalorder %v310, 2
        %vm331 = vcmp.lt.s32.totalorder %v310, 3
        %vm332 = vcmp.lt.s32.totalorder %v310, 4
        %v333 = vsel %vm329, %v313, %v316
        %v334 = vsel %vm332, %v322, 2102212464
        %v335 = vsel %vm331, %v319, %v334
        %v336 = vsel %vm330, %v333, %v335
        %v337 = vsel %vm329, %v316, %v319
        %v338 = vsel %vm332, %v325, 920167782
        %v339 = vsel %vm331, %v322, %v338
        %v340 = vsel %vm330, %v337, %v339
        %v341 = vsel %vm329, %v319, %v322
        %v342 = vsel %vm332, %v328, 1326507024
        %v343 = vsel %vm331, %v325, %v342
        %v344 = vsel %vm330, %v341, %v343
        %v345 = vshll.u32 %v305, 8
        %v346 = vmul.u32.u64.compose %v345, %v344
        %v347 = vextract.low.u32 %v346
        %v348 = vextract.high.u32 %v346
        %v349 = vmul.u32.u64.compose %v345, %v340
        %v350 = vextract.low.u32 %v349
        %v351 = vextract.high.u32 %v349
        %v352 = vmul.u32 %v345, %v336
        %v353 = vadd.s32 %v348, %v350
        %vm354 = vc.u32 %v348, %v350
        %v355 = vadd.s32 %v351, 1
        %v356 = vsel %vm354, %v355, %v351
        %v357 = vadd.s32 %v352, %v356
        %v358 = vadd.s32 %v357, 536870912
        %v359 = vshrl.u32 %v358, 30
        %v360 = vshll.u32 %v359, 30
        %v361 = vsub.s32 %v357, %v360
        %vm362 = vcmp.lt.s32.totalorder %v361, 0
        %v363 = vsub.s32 0, %v361
        %v364 = vsel %vm362, %v363, %v361
        %v365 = vclz %v364
        %v366 = vsub.s32 %v365, 2
        %vm367 = vcmp.gt.s32.totalorder 0, %v366
        %v368 = vsel %vm367, 0, %v366
        %v369 = vsub.s32 32, %v368
        %v370 = vshll.u32 %v361, %v368
        %v371 = vshrl.u32 %v353, %v369
        %v372 = vor.u32 %v370, %v371
        %v373 = vsub.s32 4294967266, %v368
        %v374 = vadd.s32 %v373, 127
        %v375 = vshll.u32 %v374, 23
        %v376 = vor.u32 4788187, %v375
        %v377 = vand.u32 2147483647, %v376
        %v379 = vcvt.s32.f32 %v372
        %v380 = vmul.f32 %v379, %v377
        %v381 = vxor.u32 %v380, 2147483648
        %v382 = vsel %vm299, %v381, %v380
        %v383 = vsub.s32 4, %v359
        %v384 = vsel %vm299, %v383, %v359
        %v385 = vsel %vm298, %v291, %v382
        %v386 = vsel %vm298, 0, %v384
        %v387 = vcosq.f32.pop %v385
        %v388 = vsinq.f32.pop %v385
        %vm389 = vweird.f32 %v291
        %v390 = vadd.s32 %v386, 3
        %v391 = vand.u32 %v390, 3
        %vm392 = vcmp.lt.s32.totalorder %v391, 2
        %vm393 = vcmp.eq.s32.totalorder %v391, 0
        %v394 = vxor.u32 %v388, 2147483648
        %v395 = vsel %vm393, %v387, %v394
        %vm396 = vcmp.eq.s32.totalorder %v391, 2
        %v397 = vxor.u32 %v387, 2147483648
        %v398 = vsel %vm396, %v397, %v388
        %v399 = vsel %vm392, %v395, %v398
        %v400 = vsel %vm389, nan, %v399
        %v401 = vand.u32 2147483647, %v295
        %vm402 = vcmp.le.f32.partialorder %v401, 0.7853982
        %vm403 = vcmp.lt.s32.totalorder %v295, 0
        %v404 = vand.u32 %v295, 2139095040
        %v405 = vshrl.u32 %v404, 23
        %v406 = vsub.s32 %v405, 127
        %v407 = vand.u32 2147483647, %v295
        %v408 = vand.u32 %v407, 8388607
        %v409 = vor.u32 %v408, 8388608
        %v410 = vsub.s32 0, %v409
        %v411 = vadd.s32 %v406, 1
        %vm412 = vcmp.gt.s32.totalorder %v411, 0
        %v413 = vsel %vm412, %v411, 0
        %v414 = vshrl.u32 %v413, 5
        %v415 = vand.u32 %v413, 31
        %v416 = vsub.s32 32, %v415
        %v417 = vshrl.u32 683565275, %v416
        %v418 = vshll.u32 683565275, %v415
        %v419 = vshrl.u32 2475754826, %v416
        %v420 = vor.u32 %v418, %v419
        %v421 = vshll.u32 2475754826, %v415
        %v422 = vshrl.u32 2131351028, %v416
        %v423 = vor.u32 %v421, %v422
        %v424 = vshll.u32 2131351028, %v415
        %v425 = vshrl.u32 2102212464, %v416
        %v426 = vor.u32 %v424, %v425
        %v427 = vshll.u32 2102212464, %v415
        %v428 = vshrl.u32 920167782, %v416
        %v429 = vor.u32 %v427, %v428
        %v430 = vshll.u32 920167782, %v415
        %v431 = vshrl.u32 1326507024, %v416
        %v432 = vor.u32 %v430, %v431
        %vm433 = vcmp.lt.s32.totalorder %v414, 1
        %vm434 = vcmp.lt.s32.totalorder %v414, 2
        %vm435 = vcmp.lt.s32.totalorder %v414, 3
        %vm436 = vcmp.lt.s32.totalorder %v414, 4
        %v437 = vsel %vm433, %v417, %v420
        %v438 = vsel %vm436, %v426, 2102212464
        %v439 = vsel %vm435, %v423, %v438
        %v440 = vsel %vm434, %v437, %v439
        %v441 = vsel %vm433, %v420, %v423
        %v442 = vsel %vm436, %v429, 920167782
        %v443 = vsel %vm435, %v426, %v442
        %v444 = vsel %vm434, %v441, %v443
        %v445 = vsel %vm433, %v423, %v426
        %v446 = vsel %vm436, %v432, 1326507024
        %v447 = vsel %vm435, %v429, %v446
        %v448 = vsel %vm434, %v445, %v447
        %v449 = vshll.u32 %v409, 8
        %v450 = vmul.u32.u64.compose %v449, %v448
        %v451 = vextract.low.u32 %v450
        %v452 = vextract.high.u32 %v450
        %v453 = vmul.u32.u64.compose %v449, %v444
        %v454 = vextract.low.u32 %v453
        %v455 = vextract.high.u32 %v453
        %v456 = vmul.u32 %v449, %v440
        %v457 = vadd.s32 %v452, %v454
        %vm458 = vc.u32 %v452, %v454
        %v459 = vadd.s32 %v455, 1
        %v460 = vsel %vm458, %v459, %v455
        %v461 = vadd.s32 %v456, %v460
        %v462 = vadd.s32 %v461, 536870912
        %v463 = vshrl.u32 %v462, 30
        %v464 = vshll.u32 %v463, 30
        %v465 = vsub.s32 %v461, %v464
        %vm466 = vcmp.lt.s32.totalorder %v465, 0
        %v467 = vsub.s32 0, %v465
        %v468 = vsel %vm466, %v467, %v465
        %v469 = vclz %v468
        %v470 = vsub.s32 %v469, 2
        %vm471 = vcmp.gt.s32.totalorder 0, %v470
        %v472 = vsel %vm471, 0, %v470
        %v473 = vsub.s32 32, %v472
        %v474 = vshll.u32 %v465, %v472
        %v475 = vshrl.u32 %v457, %v473
        %v476 = vor.u32 %v474, %v475
        %v477 = vsub.s32 4294967266, %v472
        %v478 = vadd.s32 %v477, 127
        %v479 = vshll.u32 %v478, 23
        %v480 = vor.u32 4788187, %v479
        %v481 = vand.u32 2147483647, %v480
        %v483 = vcvt.s32.f32 %v476
        %v484 = vmul.f32 %v483, %v481
        %v485 = vxor.u32 %v484, 2147483648
        %v486 = vsel %vm403, %v485, %v484
        %v487 = vsub.s32 4, %v463
        %v488 = vsel %vm403, %v487, %v463
        %v489 = vsel %vm402, %v295, %v486
        %v490 = vsel %vm402, 0, %v488
        %v491 = vcosq.f32.pop %v489
        %v492 = vsinq.f32.pop %v489
        %vm493 = vweird.f32 %v295
        %v494 = vadd.s32 %v490, 3
        %v495 = vand.u32 %v494, 3
        %vm496 = vcmp.lt.s32.totalorder %v495, 2
        %vm497 = vcmp.eq.s32.totalorder %v495, 0
        %v498 = vxor.u32 %v492, 2147483648
        %v499 = vsel %vm497, %v491, %v498
        %vm500 = vcmp.eq.s32.totalorder %v495, 2
        %v501 = vxor.u32 %v491, 2147483648
        %v502 = vsel %vm500, %v501, %v492
        %v503 = vsel %vm496, %v499, %v502
        %v504 = vsel %vm493, nan, %v503
        %v505 = vpack.c.bf16 %v504, %v400
        %v506 = vand.u32 2147483647, %v291
        %vm507 = vcmp.le.f32.partialorder %v506, 0.7853982
        %vm508 = vcmp.lt.s32.totalorder %v291, 0
        %v509 = vand.u32 %v291, 2139095040
        %v510 = vshrl.u32 %v509, 23
        %v511 = vsub.s32 %v510, 127
        %v512 = vand.u32 2147483647, %v291
        %v513 = vand.u32 %v512, 8388607
        %v514 = vor.u32 %v513, 8388608
        %v515 = vsub.s32 0, %v514
        %v516 = vadd.s32 %v511, 1
        %vm517 = vcmp.gt.s32.totalorder %v516, 0
        %v518 = vsel %vm517, %v516, 0
        %v519 = vshrl.u32 %v518, 5
        %v520 = vand.u32 %v518, 31
        %v521 = vsub.s32 32, %v520
        %v522 = vshrl.u32 683565275, %v521
        %v523 = vshll.u32 683565275, %v520
        %v524 = vshrl.u32 2475754826, %v521
        %v525 = vor.u32 %v523, %v524
        %v526 = vshll.u32 2475754826, %v520
        %v527 = vshrl.u32 2131351028, %v521
        %v528 = vor.u32 %v526, %v527
        %v529 = vshll.u32 2131351028, %v520
        %v530 = vshrl.u32 2102212464, %v521
        %v531 = vor.u32 %v529, %v530
        %v532 = vshll.u32 2102212464, %v520
        %v533 = vshrl.u32 920167782, %v521
        %v534 = vor.u32 %v532, %v533
        %v535 = vshll.u32 920167782, %v520
        %v536 = vshrl.u32 1326507024, %v521
        %v537 = vor.u32 %v535, %v536
        %vm538 = vcmp.lt.s32.totalorder %v519, 1
        %vm539 = vcmp.lt.s32.totalorder %v519, 2
        %vm540 = vcmp.lt.s32.totalorder %v519, 3
        %vm541 = vcmp.lt.s32.totalorder %v519, 4
        %v542 = vsel %vm538, %v522, %v525
        %v543 = vsel %vm541, %v531, 2102212464
        %v544 = vsel %vm540, %v528, %v543
        %v545 = vsel %vm539, %v542, %v544
        %v546 = vsel %vm538, %v525, %v528
        %v547 = vsel %vm541, %v534, 920167782
        %v548 = vsel %vm540, %v531, %v547
        %v549 = vsel %vm539, %v546, %v548
        %v550 = vsel %vm538, %v528, %v531
        %v551 = vsel %vm541, %v537, 1326507024
        %v552 = vsel %vm540, %v534, %v551
        %v553 = vsel %vm539, %v550, %v552
        %v554 = vshll.u32 %v514, 8
        %v555 = vmul.u32.u64.compose %v554, %v553
        %v556 = vextract.low.u32 %v555
        %v557 = vextract.high.u32 %v555
        %v558 = vmul.u32.u64.compose %v554, %v549
        %v559 = vextract.low.u32 %v558
        %v560 = vextract.high.u32 %v558
        %v561 = vmul.u32 %v554, %v545
        %v562 = vadd.s32 %v557, %v559
        %vm563 = vc.u32 %v557, %v559
        %v564 = vadd.s32 %v560, 1
        %v565 = vsel %vm563, %v564, %v560
        %v566 = vadd.s32 %v561, %v565
        %v567 = vadd.s32 %v566, 536870912
        %v568 = vshrl.u32 %v567, 30
        %v569 = vshll.u32 %v568, 30
        %v570 = vsub.s32 %v566, %v569
        %vm571 = vcmp.lt.s32.totalorder %v570, 0
        %v572 = vsub.s32 0, %v570
        %v573 = vsel %vm571, %v572, %v570
        %v574 = vclz %v573
        %v575 = vsub.s32 %v574, 2
        %vm576 = vcmp.gt.s32.totalorder 0, %v575
        %v577 = vsel %vm576, 0, %v575
        %v578 = vsub.s32 32, %v577
        %v579 = vshll.u32 %v570, %v577
        %v580 = vshrl.u32 %v562, %v578
        %v581 = vor.u32 %v579, %v580
        %v582 = vsub.s32 4294967266, %v577
        %v583 = vadd.s32 %v582, 127
        %v584 = vshll.u32 %v583, 23
        %v585 = vor.u32 4788187, %v584
        %v586 = vand.u32 2147483647, %v585
        %v588 = vcvt.s32.f32 %v581
        %v589 = vmul.f32 %v588, %v586
        %v590 = vxor.u32 %v589, 2147483648
        %v591 = vsel %vm508, %v590, %v589
        %v592 = vsub.s32 4, %v568
        %v593 = vsel %vm508, %v592, %v568
        %v594 = vsel %vm507, %v291, %v591
        %v595 = vsel %vm507, 0, %v593
        %v596 = vcosq.f32.pop %v594
        %v597 = vsinq.f32.pop %v594
        %vm598 = vweird.f32 %v291
        %v599 = vand.u32 %v595, 3
        %vm600 = vcmp.lt.s32.totalorder %v599, 2
        %vm601 = vcmp.eq.s32.totalorder %v599, 0
        %v602 = vxor.u32 %v597, 2147483648
        %v603 = vsel %vm601, %v596, %v602
        %vm604 = vcmp.eq.s32.totalorder %v599, 2
        %v605 = vxor.u32 %v596, 2147483648
        %v606 = vsel %vm604, %v605, %v597
        %v607 = vsel %vm600, %v603, %v606
        %v608 = vsel %vm598, nan, %v607
        %v609 = vand.u32 2147483647, %v295
        %vm610 = vcmp.le.f32.partialorder %v609, 0.7853982
        %vm611 = vcmp.lt.s32.totalorder %v295, 0
        %v612 = vand.u32 %v295, 2139095040
        %v613 = vshrl.u32 %v612, 23
        %v614 = vsub.s32 %v613, 127
        %v615 = vand.u32 2147483647, %v295
        %v616 = vand.u32 %v615, 8388607
        %v617 = vor.u32 %v616, 8388608
        %v618 = vsub.s32 0, %v617
        %v619 = vadd.s32 %v614, 1
        %vm620 = vcmp.gt.s32.totalorder %v619, 0
        %v621 = vsel %vm620, %v619, 0
        %v622 = vshrl.u32 %v621, 5
        %v623 = vand.u32 %v621, 31
        %v624 = vsub.s32 32, %v623
        %v625 = vshrl.u32 683565275, %v624
        %v626 = vshll.u32 683565275, %v623
        %v627 = vshrl.u32 2475754826, %v624
        %v628 = vor.u32 %v626, %v627
        %v629 = vshll.u32 2475754826, %v623
        %v630 = vshrl.u32 2131351028, %v624
        %v631 = vor.u32 %v629, %v630
        %v632 = vshll.u32 2131351028, %v623
        %v633 = vshrl.u32 2102212464, %v624
        %v634 = vor.u32 %v632, %v633
        %v635 = vshll.u32 2102212464, %v623
        %v636 = vshrl.u32 920167782, %v624
        %v637 = vor.u32 %v635, %v636
        %v638 = vshll.u32 920167782, %v623
        %v639 = vshrl.u32 1326507024, %v624
        %v640 = vor.u32 %v638, %v639
        %vm641 = vcmp.lt.s32.totalorder %v622, 1
        %vm642 = vcmp.lt.s32.totalorder %v622, 2
        %vm643 = vcmp.lt.s32.totalorder %v622, 3
        %vm644 = vcmp.lt.s32.totalorder %v622, 4
        %v645 = vsel %vm641, %v625, %v628
        %v646 = vsel %vm644, %v634, 2102212464
        %v647 = vsel %vm643, %v631, %v646
        %v648 = vsel %vm642, %v645, %v647
        %v649 = vsel %vm641, %v628, %v631
        %v650 = vsel %vm644, %v637, 920167782
        %v651 = vsel %vm643, %v634, %v650
        %v652 = vsel %vm642, %v649, %v651
        %v653 = vsel %vm641, %v631, %v634
        %v654 = vsel %vm644, %v640, 1326507024
        %v655 = vsel %vm643, %v637, %v654
        %v656 = vsel %vm642, %v653, %v655
        %v657 = vshll.u32 %v617, 8
        %v658 = vmul.u32.u64.compose %v657, %v656
        %v659 = vextract.low.u32 %v658
        %v660 = vextract.high.u32 %v658
        %v661 = vmul.u32.u64.compose %v657, %v652
        %v662 = vextract.low.u32 %v661
        %v663 = vextract.high.u32 %v661
        %v664 = vmul.u32 %v657, %v648
        %v665 = vadd.s32 %v660, %v662
        %vm666 = vc.u32 %v660, %v662
        %v667 = vadd.s32 %v663, 1
        %v668 = vsel %vm666, %v667, %v663
        %v669 = vadd.s32 %v664, %v668
        %v670 = vadd.s32 %v669, 536870912
        %v671 = vshrl.u32 %v670, 30
        %v672 = vshll.u32 %v671, 30
        %v673 = vsub.s32 %v669, %v672
        %vm674 = vcmp.lt.s32.totalorder %v673, 0
        %v675 = vsub.s32 0, %v673
        %v676 = vsel %vm674, %v675, %v673
        %v677 = vclz %v676
        %v678 = vsub.s32 %v677, 2
        %vm679 = vcmp.gt.s32.totalorder 0, %v678
        %v680 = vsel %vm679, 0, %v678
        %v681 = vsub.s32 32, %v680
        %v682 = vshll.u32 %v673, %v680
        %v683 = vshrl.u32 %v665, %v681
        %v684 = vor.u32 %v682, %v683
        %v685 = vsub.s32 4294967266, %v680
        %v686 = vadd.s32 %v685, 127
        %v687 = vshll.u32 %v686, 23
        %v688 = vor.u32 4788187, %v687
        %v689 = vand.u32 2147483647, %v688
        %v691 = vcvt.s32.f32 %v684
        %v692 = vmul.f32 %v691, %v689
        %v693 = vxor.u32 %v692, 2147483648
        %v694 = vsel %vm611, %v693, %v692
        %v695 = vsub.s32 4, %v671
        %v696 = vsel %vm611, %v695, %v671
        %v697 = vsel %vm610, %v295, %v694
        %v698 = vsel %vm610, 0, %v696
        %v699 = vcosq.f32.pop %v697
        %v700 = vsinq.f32.pop %v697
        %vm701 = vweird.f32 %v295
        %v702 = vand.u32 %v698, 3
        %vm703 = vcmp.lt.s32.totalorder %v702, 2
        %vm704 = vcmp.eq.s32.totalorder %v702, 0
        %v705 = vxor.u32 %v700, 2147483648
        %v706 = vsel %vm704, %v699, %v705
        %vm707 = vcmp.eq.s32.totalorder %v702, 2
        %v708 = vxor.u32 %v699, 2147483648
        %v709 = vsel %vm707, %v708, %v700
        %v710 = vsel %vm703, %v706, %v709
        %v711 = vsel %vm701, nan, %v710
        %v712 = vpack.c.bf16 %v711, %v608
        %v713 = vld [vmem:[%s1] sm:$0xf]
        %v714 = vld [vmem:[%s1 + $0x4] sm:$0xf]
        %v715 = vld [vmem:[%s1 + $0x8] sm:$0xf]
        %v716 = vld [vmem:[%s1 + $0xc] sm:$0xf]
        %v717 = vld [vmem:[%s2] sm:$0xf]
        %v718 = vld [vmem:[%s2 + $0x4] sm:$0xf]
        %v719 = vld [vmem:[%s2 + $0x8] sm:$0xf]
        %v720 = vld [vmem:[%s2 + $0xc] sm:$0xf]
        %v725 = vunpack.c.l.b16 %v717
        %v726 = vunpack.c.l.b16 %v718
        %v727 = vunpack.c.l.b16 %v719
        %v728 = vunpack.c.l.b16 %v720
        %v729 = vpack.c.b16 %v726, %v725
        %v730 = vpack.c.b16 %v728, %v727
        %vm731 = vcmask 130048
        %v733 = vsel %vm731, %v729, 0
        %v736 = vsel %vm731, %v730, 0
        %738 = vmatprep.subr.bf16.mxu0 0
        %739 = vmatpush1.bf16.msra.mxu0 %v505
        %740 = vmatprep.subr.bf16.mxu0 0
        %741 = vmatpush1.bf16.msra.mxu0 0
        %742 = vmatprep.subr.bf16.mxu0 0
        %743 = vmatpush1.bf16.msra.mxu0 0
        %744 = vmatprep.subr.bf16.mxu0 0
        %745 = vmatpush1.bf16.msra.mxu0 0
        %746 = vmatprep.subr.bf16.mxu0 0
        %747 = vmatpush1.bf16.msra.mxu0 0
        %748 = vmatprep.subr.bf16.mxu0 0
        %749 = vmatpush1.bf16.msra.mxu0 0
        %750 = vmatprep.subr.bf16.mxu0 0
        %751 = vmatpush1.bf16.msra.mxu0 0
        %752 = vmatprep.subr.bf16.mxu0 0
        %753 = vmatpush1.bf16.msra.mxu0 0
        %754 = vmatprep.subr.bf16.mxu0 0
        %755 = vmatpush1.bf16.msra.mxu0 0
        %756 = vmatprep.subr.bf16.mxu0 0
        %757 = vmatpush1.bf16.msra.mxu0 0
        %758 = vmatprep.subr.bf16.mxu0 0
        %759 = vmatpush1.bf16.msra.mxu0 0
        %760 = vmatprep.subr.bf16.mxu0 0
        %761 = vmatpush1.bf16.msra.mxu0 0
        %762 = vmatprep.subr.bf16.mxu0 0
        %763 = vmatpush1.bf16.msra.mxu0 0
        %764 = vmatprep.subr.bf16.mxu0 0
        %765 = vmatpush1.bf16.msra.mxu0 0
        %766 = vmatprep.subr.bf16.mxu0 0
        %767 = vmatpush1.bf16.msra.mxu0 0
        %768 = vmatprep.subr.bf16.mxu0 0
        %769 = vmatpush1.bf16.msra.mxu0 0
        %770 = vmatprep.mubr.bf16.mxu0 0
        %771 = vmatmul.mubr.bf16.gmra.mrb[0].mxu0 %v733
        %v772 = vpop.f32.mrb[0].mxu0
        %v773 = vadd.f32 0.0, %v772
        %v774 = vpop.f32.mrb[0].mxu0
        %v775 = vpop.f32.mrb[0].mxu0
        %v776 = vadd.f32 0.0, %v775
        %v777 = vpop.f32.mrb[0].mxu0
        %778 = vmatprep.mubr.bf16.mxu0 0
        %779 = vmatmul.mubr.bf16.gmra.mrb[0].mxu0 %v736
        %v780 = vpop.f32.mrb[0].mxu0
        %v781 = vadd.f32 0.0, %v780
        %v782 = vpop.f32.mrb[0].mxu0
        %v783 = vpop.f32.mrb[0].mxu0
        %v784 = vadd.f32 0.0, %v783
        %v785 = vpop.f32.mrb[0].mxu0
        %786 = vdwg.mxu0
        %v791 = vunpack.c.l.b16 %v713
        %v792 = vunpack.c.l.b16 %v714
        %v793 = vunpack.c.l.b16 %v715
        %v794 = vunpack.c.l.b16 %v716
        %v795 = vpack.c.b16 %v792, %v791
        %v796 = vpack.c.b16 %v794, %v793
        %v798 = vsel %vm731, %v795, 0
        %v801 = vsel %vm731, %v796, 0
        %803 = vmatprep.subr.bf16.mxu0 0
        %804 = vmatpush1.bf16.msra.mxu0 %v296
        %805 = vmatprep.subr.bf16.mxu0 0
        %806 = vmatpush1.bf16.msra.mxu0 0
        %807 = vmatprep.subr.bf16.mxu0 0
        %808 = vmatpush1.bf16.msra.mxu0 0
        %809 = vmatprep.subr.bf16.mxu0 0
        %810 = vmatpush1.bf16.msra.mxu0 0
        %811 = vmatprep.subr.bf16.mxu0 0
        %812 = vmatpush1.bf16.msra.mxu0 0
        %813 = vmatprep.subr.bf16.mxu0 0
        %814 = vmatpush1.bf16.msra.mxu0 0
        %815 = vmatprep.subr.bf16.mxu0 0
        %816 = vmatpush1.bf16.msra.mxu0 0
        %817 = vmatprep.subr.bf16.mxu0 0
        %818 = vmatpush1.bf16.msra.mxu0 0
        %819 = vmatprep.subr.bf16.mxu0 0
        %820 = vmatpush1.bf16.msra.mxu0 0
        %821 = vmatprep.subr.bf16.mxu0 0
        %822 = vmatpush1.bf16.msra.mxu0 0
        %823 = vmatprep.subr.bf16.mxu0 0
        %824 = vmatpush1.bf16.msra.mxu0 0
        %825 = vmatprep.subr.bf16.mxu0 0
        %826 = vmatpush1.bf16.msra.mxu0 0
        %827 = vmatprep.subr.bf16.mxu0 0
        %828 = vmatpush1.bf16.msra.mxu0 0
        %829 = vmatprep.subr.bf16.mxu0 0
        %830 = vmatpush1.bf16.msra.mxu0 0
        %831 = vmatprep.subr.bf16.mxu0 0
        %832 = vmatpush1.bf16.msra.mxu0 0
        %833 = vmatprep.subr.bf16.mxu0 0
        %834 = vmatpush1.bf16.msra.mxu0 0
        %835 = vmatprep.mubr.bf16.mxu0 0
        %836 = vmatmul.mubr.bf16.gmra.mrb[0].mxu0 %v798
        %v837 = vpop.f32.mrb[0].mxu0
        %v838 = vadd.f32 %v773, %v837
        %v839 = vpop.f32.mrb[0].mxu0
        %v840 = vpop.f32.mrb[0].mxu0
        %v841 = vadd.f32 %v776, %v840
        %v842 = vpop.f32.mrb[0].mxu0
        %843 = vmatprep.mubr.bf16.mxu0 0
        %844 = vmatmul.mubr.bf16.gmra.mrb[0].mxu0 %v801
        %v845 = vpop.f32.mrb[0].mxu0
        %v846 = vadd.f32 %v781, %v845
        %v847 = vpop.f32.mrb[0].mxu0
        %v848 = vpop.f32.mrb[0].mxu0
        %v849 = vadd.f32 %v784, %v848
        %v850 = vpop.f32.mrb[0].mxu0
        %851 = vdwg.mxu0
        %v852 = vld [vmem:[%s3] sm:$0xf]
        %v853 = vld [vmem:[%s3 + $0x4] sm:$0xf]
        %v854 = vld [vmem:[%s3 + $0x8] sm:$0xf]
        %v855 = vld [vmem:[%s3 + $0xc] sm:$0xf]
        %v860 = vunpack.c.l.b16 %v852
        %v861 = vunpack.c.l.b16 %v853
        %v862 = vunpack.c.l.b16 %v854
        %v863 = vunpack.c.l.b16 %v855
        %v864 = vpack.c.b16 %v861, %v860
        %v865 = vpack.c.b16 %v863, %v862
        %v867 = vsel %vm731, %v864, 0
        %v870 = vsel %vm731, %v865, 0
        %872 = vmatprep.subr.bf16.mxu0 0
        %873 = vmatpush1.bf16.msra.mxu0 %v712
        %874 = vmatprep.subr.bf16.mxu0 0
        %875 = vmatpush1.bf16.msra.mxu0 0
        %876 = vmatprep.subr.bf16.mxu0 0
        %877 = vmatpush1.bf16.msra.mxu0 0
        %878 = vmatprep.subr.bf16.mxu0 0
        %879 = vmatpush1.bf16.msra.mxu0 0
        %880 = vmatprep.subr.bf16.mxu0 0
        %881 = vmatpush1.bf16.msra.mxu0 0
        %882 = vmatprep.subr.bf16.mxu0 0
        %883 = vmatpush1.bf16.msra.mxu0 0
        %884 = vmatprep.subr.bf16.mxu0 0
        %885 = vmatpush1.bf16.msra.mxu0 0
        %886 = vmatprep.subr.bf16.mxu0 0
        %887 = vmatpush1.bf16.msra.mxu0 0
        %888 = vmatprep.subr.bf16.mxu0 0
        %889 = vmatpush1.bf16.msra.mxu0 0
        %890 = vmatprep.subr.bf16.mxu0 0
        %891 = vmatpush1.bf16.msra.mxu0 0
        %892 = vmatprep.subr.bf16.mxu0 0
        %893 = vmatpush1.bf16.msra.mxu0 0
        %894 = vmatprep.subr.bf16.mxu0 0
        %895 = vmatpush1.bf16.msra.mxu0 0
        %896 = vmatprep.subr.bf16.mxu0 0
        %897 = vmatpush1.bf16.msra.mxu0 0
        %898 = vmatprep.subr.bf16.mxu0 0
        %899 = vmatpush1.bf16.msra.mxu0 0
        %900 = vmatprep.subr.bf16.mxu0 0
        %901 = vmatpush1.bf16.msra.mxu0 0
        %902 = vmatprep.subr.bf16.mxu0 0
        %903 = vmatpush1.bf16.msra.mxu0 0
        %904 = vmatprep.mubr.bf16.mxu0 0
        %905 = vmatmul.mubr.bf16.gmra.mrb[0].mxu0 %v867
        %v906 = vpop.f32.mrb[0].mxu0
        %v907 = vadd.f32 0.0, %v906
        %v908 = vpop.f32.mrb[0].mxu0
        %v909 = vpop.f32.mrb[0].mxu0
        %v910 = vadd.f32 0.0, %v909
        %v911 = vpop.f32.mrb[0].mxu0
        %912 = vmatprep.mubr.bf16.mxu0 0
        %913 = vmatmul.mubr.bf16.gmra.mrb[0].mxu0 %v870
        %v914 = vpop.f32.mrb[0].mxu0
        %v915 = vadd.f32 0.0, %v914
        %v916 = vpop.f32.mrb[0].mxu0
        %v917 = vpop.f32.mrb[0].mxu0
        %v918 = vadd.f32 0.0, %v917
        %v919 = vpop.f32.mrb[0].mxu0
        %920 = vdwg.mxu0
        %v921 = vadd.f32 %v838, %v907
        %v922 = vadd.f32 %v841, %v910
        %v923 = vadd.f32 %v846, %v915
        %v924 = vadd.f32 %v849, %v918
        %v925 = vld [vmem:[%s4] sm:$0xff]
        %v926 = vld [vmem:[%s4 + $0x8] sm:$0xff]
        %v927 = vld [vmem:[%s4 + $0x10] sm:$0xff]
        %v928 = vld [vmem:[%s4 + $0x18] sm:$0xff]
        %930 = vset.pattern.permute.xlu0 0
        %931 = vperm.xlu0 %930, %v925
        %v932 = vpop.permute.xlu0 %931
        %935 = vset.pattern.permute.xlu0 0
        %936 = vperm.xlu0 %935, %v926
        %v937 = vpop.permute.xlu0 %936
        %940 = vset.pattern.permute.xlu0 0
        %941 = vperm.xlu0 %940, %v927
        %v942 = vpop.permute.xlu0 %941
        %945 = vset.pattern.permute.xlu0 0
        %946 = vperm.xlu0 %945, %v928
        %v947 = vpop.permute.xlu0 %946
        %v949 = vadd.f32 %v921, %v932
        %v950 = vadd.f32 %v922, %v937
        %v951 = vadd.f32 %v923, %v942
        %v952 = vadd.f32 %v924, %v947
        %v953 = vmax.f32 %v949, 0.0
        %v954 = vmax.f32 %v950, 0.0
        %v955 = vmax.f32 %v951, 0.0
        %v956 = vmax.f32 %v952, 0.0
        %v957 = vld [vmem:[%s5] sm:$0x3]
        %v958 = vpack.c.bf16 %v954, %v953
        %v959 = vpack.c.bf16 %v956, %v955
        %v960 = vld [vmem:[%s6] sm:$0xf]
        %962 = vset.pattern.permute.xlu0 0
        %963 = vperm.xlu0 %962, %v960
        %v964 = vpop.permute.xlu0 %963
        %vm966 = vcmask 261120
        %v968 = vsel %vm966, %v957, 0
        %970 = vmatprep.subr.bf16.mxu0 0
        %971 = vmatpush1.bf16.msra.mxu0 %v958
        %972 = vmatprep.subr.bf16.mxu0 0
        %973 = vmatpush1.bf16.msra.mxu0 %v959
        %974 = vmatprep.subr.bf16.mxu0 0
        %975 = vmatpush1.bf16.msra.mxu0 0
        %976 = vmatprep.subr.bf16.mxu0 0
        %977 = vmatpush1.bf16.msra.mxu0 0
        %978 = vmatprep.subr.bf16.mxu0 0
        %979 = vmatpush1.bf16.msra.mxu0 0
        %980 = vmatprep.subr.bf16.mxu0 0
        %981 = vmatpush1.bf16.msra.mxu0 0
        %982 = vmatprep.subr.bf16.mxu0 0
        %983 = vmatpush1.bf16.msra.mxu0 0
        %984 = vmatprep.subr.bf16.mxu0 0
        %985 = vmatpush1.bf16.msra.mxu0 0
        %986 = vmatprep.subr.bf16.mxu0 0
        %987 = vmatpush1.bf16.msra.mxu0 0
        %988 = vmatprep.subr.bf16.mxu0 0
        %989 = vmatpush1.bf16.msra.mxu0 0
        %990 = vmatprep.subr.bf16.mxu0 0
        %991 = vmatpush1.bf16.msra.mxu0 0
        %992 = vmatprep.subr.bf16.mxu0 0
        %993 = vmatpush1.bf16.msra.mxu0 0
        %994 = vmatprep.subr.bf16.mxu0 0
        %995 = vmatpush1.bf16.msra.mxu0 0
        %996 = vmatprep.subr.bf16.mxu0 0
        %997 = vmatpush1.bf16.msra.mxu0 0
        %998 = vmatprep.subr.bf16.mxu0 0
        %999 = vmatpush1.bf16.msra.mxu0 0
        %1000 = vmatprep.subr.bf16.mxu0 0
        %1001 = vmatpush1.bf16.msra.mxu0 0
        %1002 = vmatprep.mubr.bf16.mxu0 0
        %1003 = vmatmul.mubr.bf16.gmra.mrb[0].mxu0 %v968
        %v1004 = vpop.f32.mrb[0].mxu0
        %v1005 = vadd.f32 %v964, %v1004
        %v1006 = vpop.f32.mrb[0].mxu0
        %v1007 = vpop.f32.mrb[0].mxu0
        %v1008 = vpop.f32.mrb[0].mxu0
        %1009 = vdwg.mxu0
        %v1010 = vxor.u32 %v1005, 2147483648
        %v1011 = vmul.f32 %v1010, 1.442695
        %v1012 = vpow.pop %v1011
        %v1013 = vadd.f32 %v1012, 1.0
        %v1014 = vrcp.pop %v1013
        %v1015 = vmul.f32 1.0, %v1014
        %1016 = vst [vmem:[%s269] sm:$0x7] %v1015
        %v1017 = vmax.f32 %v1005, 0.0
        %1018 = vst [vmem:[%s269] sm:$0x8] %v1017
        %s1019 = sand.u32 %s181, 1
        %s1020 = scalar_lea.sflag [#allocation3], %s1019
        %s1021 = sand.u32 %s181, 1
        %s1022 = smul.addr %s1021, 4
        %s1023 = scalar_lea.vmem [#allocation2], %s1022
        // Predicated region
        $region49: #{tpu_custom_call.1} parent=47 // pred_check
          %p1024 = pneg %p191
        $region50: #{tpu_custom_call.1} parent=47 // pred_check_branch
          %1026 = sbr.rel (%p1024) target = $region52
        $region51: #{tpu_custom_call.1} parent=47 // pred_region
          %s1028 = ssub.s32 64, 64
          %1029 = vsyncadd %s1020, %s1028
          %s1030 = smul.addr %s21, 64
          %s1031 = scalar_lea.hbm %s7, %s1030
          %s1033 = sshll.u32 %s1023, 4
          %s1034 = int_to_ptr.vmem [resolvable:$true] %s1033
          %1036 = dma.vmem_to_hbm [thread:$0]  %s1034, 64, %s1031, %s1020
        $region52: #{tpu_custom_call.1} parent=47 // pred_fallthru
          _
      $region48: #{tpu_custom_call.1} parent=5 // pred_fallthru
        _
      %p1037 = scmp.le.s32.totalorder 2, %s16
      // Predicated region
      $region53: #{tpu_custom_call.1} parent=5 // pred_check
        %p1038 = pneg %p1037
      $region54: #{tpu_custom_call.1} parent=5 // pred_check_branch
        %1040 = sbr.rel (%p1038) target = $region56
      $region55: #{tpu_custom_call.1} parent=5 // pred_region
        %s1041 = ssub.s32 %s16, 2
        // Predicated region
        $region57: #{tpu_custom_call.1} parent=55 // pred_check
          %p1042 = pneg %p197
        $region58: #{tpu_custom_call.1} parent=55 // pred_check_branch
          %1044 = sbr.rel (%p1042) target = $region60
        $region59: #{tpu_custom_call.1} parent=55 // pred_region
          %s1045 = sand.u32 %s182, 1
          %s1046 = scalar_lea.sflag [#allocation3], %s1045
          %s1047 = sand.u32 %s182, 1
          %s1048 = smul.addr %s1047, 4
          %s1049 = scalar_lea.vmem [#allocation2], %s1048
          %1050 = dma.done %s1046, 64
        $region60: #{tpu_custom_call.1} parent=55 // pred_fallthru
          _
      $region56: #{tpu_custom_call.1} parent=5 // pred_fallthru
        _
    $region6: #{tpu_custom_call.1} parent=1 // loop_footer
      %s20 = sadd.s32 1, %s16
    $region7: #{tpu_custom_call.1} parent=1 // loop_footer_branch
      %15 = sbr.rel target = $region3
    $region8: #{tpu_custom_call.1} parent=1 // loop_exit
      _
    %1051 = vsyncpa [#allocation3], 1
    %s1052 = scalar_lea.sflag [#allocation3], 1
    %1053 = vsyncpa %s1052, 1

</llo_original>
